<compile_context>
chip_gen: v6e
topology: v6e:2x2x1
jax: 0.10.0
libtpu: 0.0.40
codegen_flags: <defaults>
</compile_context>

<pallas_src>
import functools

import jax
import jax.numpy as jnp
from jax.experimental import pallas as pl
from jax.experimental.pallas import tpu as pltpu


def _cdiv(a, b):
    return -(-a // b)


def _partial_sums_kernel(pred_ref, target_ref, out_ref, *, epsilon, n_rows_valid,
                         tile_r, tiles_per_split, magnitude_only, need_row_mask,
                         vector_partials):
    """Accumulate per-(batch-block, split) partial sums over the row-tile axis.

    pred_ref / target_ref: (Bt, n_ch, tile_r, L) VMEM blocks.
    out_ref: (1, n_sums, 8, L) VMEM accumulator block, resident across the
             reduction grid axis. n_sums = 1 (magnitude_only) or 5.
    """
    s_idx = pl.program_id(1)
    t_idx = pl.program_id(2)

    @pl.when(t_idx == 0)
    def _init():
        out_ref[...] = jnp.zeros_like(out_ref)

    lanes = pred_ref.shape[-1]
    bt = pred_ref.shape[0]
    eps = jnp.float32(epsilon)

    def fold_add(slot, x):
        # Accumulate a (Bt, tile_r, L) f32 term into the (8, L) slab `slot`.
        if vector_partials:
            # Pure VPU adds; the cross-lane/sublane reduce is done in the JAX
            # epilogue (sum over all slab elements).
            out_ref[0, slot] += jnp.sum(x.reshape(-1, 8, lanes), axis=0)
        else:
            # Tiny-block fallback: scalar reduce, broadcast onto the slab
            # (the epilogue reads element [0, 0] in this mode).
            out_ref[0, slot] += jnp.sum(x)

    if need_row_mask:
        # Global row index of each element within the (reshaped) row axis.
        row = jax.lax.broadcasted_iota(jnp.int32, (bt, tile_r, lanes), 1)
        row_start = (s_idx * tiles_per_split + t_idx) * tile_r
        valid = (row_start + row) < n_rows_valid
    else:
        valid = None

    def masked(x):
        # NOTE: keep jnp.where (select is NaN-safe for garbage padded rows);
        # do NOT turn this into multiply-by-mask (NaN * 0 = NaN).
        return x if valid is None else jnp.where(valid, x, jnp.float32(0.0))

    if magnitude_only:
        pmag = pred_ref[:, 0].astype(jnp.float32)
        tmag = target_ref[:, 0].astype(jnp.float32)
        diff = masked(pmag - tmag)
        fold_add(0, diff * diff)                      # squared-error sum
    else:
        pbx = pred_ref[:, 0].astype(jnp.float32)
        pby = pred_ref[:, 1].astype(jnp.float32)
        pmag = pred_ref[:, 2].astype(jnp.float32)
        tbx = target_ref[:, 0].astype(jnp.float32)
        tby = target_ref[:, 1].astype(jnp.float32)
        tmag = target_ref[:, 2].astype(jnp.float32)

        # Cosine-similarity direction loss via rsqrt (EUP): no divides.
        inv_p = jax.lax.rsqrt(pbx * pbx + pby * pby + eps)
        inv_t = jax.lax.rsqrt(tbx * tbx + tby * tby + eps)
        dloss = 1.0 - (pbx * tbx + pby * tby) * (inv_p * inv_t)

        dloss = masked(dloss)
        tmag = masked(tmag)
        diff = masked(pmag - tmag)
        mask_f = (tmag > eps).astype(jnp.float32)

        fold_add(0, dloss * tmag)                     # weighted direction sum
        fold_add(1, dloss)                            # unweighted direction sum
        fold_add(2, tmag)                             # target magnitude sum
        fold_add(3, mask_f)                           # mask count
        fold_add(4, diff * diff)                      # squared-error sum


def _largest_divisor_leq(n, cap):
    cap = max(1, min(n, cap))
    for d in range(cap, 0, -1):
        if n % d == 0:
            return d
    return 1


def _chip_budgets():
    """(per-input block budget bytes, scoped-VMEM limit bytes), per generation."""
    vmem_cap = 128 * 1024 * 1024
    try:
        info = pltpu.get_tpu_info()
        vmem_cap = int(getattr(info, "vmem_capacity_bytes", vmem_cap))
    except Exception:
        pass
    if vmem_cap <= 96 * 1024 * 1024:
        # v7x-class: 64 MiB physical VMEM, 3.2 TB/s HBM -> ~4 MiB blocks.
        return 4 * 1024 * 1024, 40 * 1024 * 1024
    # v5e / v6e: 128 MiB VMEM -> big (~12 MiB) blocks to amortize grid overhead.
    return 12 * 1024 * 1024, 64 * 1024 * 1024


def blur_vector_loss(pred, target, *, lambda_dir=1.0, lambda_mag=1.0, epsilon=1e-6,
                     use_magnitude_weighting=True, magnitude_only=False,
                     block_budget_bytes=None):
    """pred, target: [B, 3, H, W] (NCHW, like the PyTorch module). f32 or bf16."""
    B, C, H, W = pred.shape
    assert C == 3, "expected 3 channels (bx, by, magnitude)"
    assert target.shape == pred.shape
    n_elems = B * H * W
    itemsize = jnp.dtype(pred.dtype).itemsize
    # Sub-32-bit inputs pack along sublanes: keep row tiles a multiple of 16 (bf16).
    sub = max(8, 8 * (4 // itemsize))

    # --- Lane-dense layout: fold H*W into rows of 128 lanes when the reshape is
    # free (contiguous, metadata-only); otherwise keep (H, W) rows.
    HW = H * W
    if W % 128 != 0 and HW % 128 == 0:
        R, L = HW // 128, 128
        pred_v = pred.reshape(B, 3, R, L)
        target_v = target.reshape(B, 3, R, L)
    else:
        R, L = H, W
        pred_v, target_v = pred, target
    L_pad = _cdiv(L, 128) * 128

    n_ch = 1 if magnitude_only else 3      # magnitude_only: load only channel 2
    ch_block = 2 if magnitude_only else 0

    block_budget, vmem_limit = _chip_budgets()
    if block_budget_bytes is not None:
        block_budget = int(block_budget_bytes)

    row_bytes = n_ch * L_pad * itemsize
    rows_budget = max(sub, (block_budget // row_bytes) // sub * sub)

    if R <= rows_budget:
        # Whole image (rows) per block; fold several batch images per step so
        # per-step DMA stays large enough to hide the grid-step overhead.
        tile_r, n_tiles = R, 1
        img_bytes = row_bytes * R
        bt = _largest_divisor_leq(B, max(1, block_budget // max(img_bytes, 1)))
        # Keep >= 2 batch blocks (parallel work for both v7x TensorCores) unless
        # a single image is too small to amortize the per-step overhead.
        if B >= 2 and bt == B and img_bytes >= (2 << 20):
            bt = _largest_divisor_leq(B, max(1, B // 2))
    else:
        bt = 1
        # Prefer a multiple-of-`sub` tile that divides R (no remainder masking).
        tile_r = 0
        cand = rows_budget
        while cand >= sub:
            if R % cand == 0:
                tile_r = cand
                break
            cand -= sub
        if tile_r < max(sub, rows_budget // 2):
            tile_r = rows_budget           # accept a masked remainder tile
        n_tiles = _cdiv(R, tile_r)

    nb = B // bt

    # Explicit dual-TensorCore split of the reduction axis when the batch axis
    # alone cannot feed both v7x cores. Enabled only when the tile count splits
    # evenly (never generates out-of-range blocks); harmless on 1-TC chips.
    n_split = 1
    if nb == 1 and n_tiles >= 2:
        if n_tiles % 2 == 1 and tile_r > sub:
            cand = tile_r - sub
            while cand >= max(sub, tile_r // 2):
                if _cdiv(R, cand) % 2 == 0:
                    tile_r = cand
                    n_tiles = _cdiv(R, cand)
                    break
                cand -= sub
        if n_tiles % 2 == 0:
            n_split = 2
    tps = n_tiles // n_split

    need_row_mask = (R % tile_r) != 0
    vector_partials = ((bt * tile_r) % 8) == 0
    n_sums = 1 if magnitude_only else 5

    kernel = functools.partial(
        _partial_sums_kernel, epsilon=float(epsilon), n_rows_valid=R,
        tile_r=tile_r, tiles_per_split=tps, magnitude_only=magnitude_only,
        need_row_mask=need_row_mask, vector_partials=vector_partials)

    def in_map(b, s, t):
        return (b, ch_block, s * tps + t, 0)

    def out_map(b, s, t):
        return (b * n_split + s, 0, 0, 0)

    steps = nb * n_split * tps
    elems_per_step = bt * tile_r * L_pad   # padded traffic per channel per step
    cost = pl.CostEstimate(
        flops=(6 if magnitude_only else 30) * steps * elems_per_step,
        transcendentals=(0 if magnitude_only else 2) * steps * elems_per_step,
        bytes_accessed=(2 * n_ch * itemsize * steps * elems_per_step
                        + nb * n_split * n_sums * 8 * L_pad * 4),
    )

    partials = pl.pallas_call(
        kernel,
        out_shape=jax.ShapeDtypeStruct((nb * n_split, n_sums, 8, L), jnp.float32),
        grid=(nb, n_split, tps),
        in_specs=[
            pl.BlockSpec((bt, n_ch, tile_r, L), in_map),
            pl.BlockSpec((bt, n_ch, tile_r, L), in_map),
        ],
        out_specs=pl.BlockSpec((1, n_sums, 8, L), out_map),
        compiler_params=pltpu.CompilerParams(
            dimension_semantics=("parallel", "parallel", "arbitrary"),
            vmem_limit_bytes=vmem_limit,
        ),
        cost_estimate=cost,
    )(pred_v, target_v)

    # Tiny epilogue in plain JAX: finish the reduction, apply the branches.
    if vector_partials:
        sums = jnp.sum(partials, axis=(0, 2, 3))           # (n_sums,)
    else:
        sums = jnp.sum(partials[:, :, 0, 0], axis=0)       # (n_sums,)

    if magnitude_only:
        magnitude_loss = sums[0] / jnp.float32(n_elems)
        direction_loss = jnp.float32(0.0)
        lambda_dir_eff = 0.0
    else:
        dir_wsum, dir_sum, tmag_sum, mask_cnt, mse_sum = (
            sums[0], sums[1], sums[2], sums[3], sums[4])
        magnitude_loss = mse_sum / jnp.float32(n_elems)
        if use_magnitude_weighting:
            direction_loss = jnp.where(
                mask_cnt > 0,
                dir_wsum / (tmag_sum + jnp.float32(epsilon)),
                dir_sum / jnp.float32(n_elems))
        else:
            direction_loss = dir_sum / jnp.float32(n_elems)
        lambda_dir_eff = lambda_dir

    total_loss = lambda_dir_eff * direction_loss + lambda_mag * magnitude_loss
    # TODO(synk): PyTorch returns host floats via .item(); we return JAX scalars.
    loss_components = {"direction_loss": direction_loss,
                       "magnitude_loss": magnitude_loss,
                       "total_loss": total_loss}
    return total_loss, loss_components


def _reference_loss(pred, target, *, lambda_dir=1.0, lambda_mag=1.0, epsilon=1e-6,
                    use_magnitude_weighting=True, magnitude_only=False):
    """Pure-JAX reference mirroring the PyTorch forward, for verification."""
    pbx, pby, pmag = pred[:, 0], pred[:, 1], pred[:, 2]
    tbx, tby, tmag = target[:, 0], target[:, 1], target[:, 2]
    direction_loss = jnp.float32(0.0)
    if not magnitude_only:
        pnorm = jnp.sqrt(pbx ** 2 + pby ** 2 + epsilon)
        tnorm = jnp.sqrt(tbx ** 2 + tby ** 2 + epsilon)
        cos = (pbx / pnorm) * (tbx / tnorm) + (pby / pnorm) * (tby / tnorm)
        dloss = 1.0 - cos
        if use_magnitude_weighting:
            direction_loss = jnp.where(
                (tmag > epsilon).sum() > 0,
                (dloss * tmag).sum() / (tmag.sum() + epsilon),
                dloss.mean())
        else:
            direction_loss = dloss.mean()
    magnitude_loss = jnp.mean((pmag - tmag) ** 2)
    lam = 0.0 if magnitude_only else lambda_dir
    return lam * direction_loss + lambda_mag * magnitude_loss


def _make_inputs(key, shape):
    k1, k2 = jax.random.split(key)
    pred = jax.random.normal(k1, shape, dtype=jnp.float32)
    target = jax.random.normal(k2, shape, dtype=jnp.float32)
    # Non-negative magnitude channel with exact zeros (exercises the mask path).
    target = target.at[:, 2].set(jnp.maximum(jnp.abs(target[:, 2]) - 0.5, 0.0))
    return pred, target


def _check(got, want, tol=1e-5):
    got = jax.block_until_ready(got)
    want = jax.block_until_ready(want)
    assert jnp.allclose(got, want, rtol=tol, atol=tol), (float(got), float(want))


if __name__ == "__main__":
    key = jax.random.PRNGKey(0)
    keys = jax.random.split(key, 3)

    # 1) Lane-dense reshape path (W=16 -> rows of 128 lanes), whole image per
    #    block, batch folding, scalar-broadcast partials. grid=(1,1,1).
    p1, t1 = _make_inputs(keys[0], (2, 3, 16, 16))
    got1, _ = blur_vector_loss(p1, t1)
    _check(got1, _reference_loss(p1, t1))

    # 2) Fallback (H, W) layout (H*W not a multiple of 128), multi-tile
    #    reduction with a masked remainder tile, (8,L) vector partials.
    p2, t2 = _make_inputs(keys[1], (2, 3, 20, 16))
    got2, _ = blur_vector_loss(p2, t2, block_budget_bytes=8 * 3 * 128 * 4)
    _check(got2, _reference_loss(p2, t2))

    # 3) B=1: explicit dual-TensorCore split of the row-tile axis
    #    (R=16 lane-dense rows, tile_r=8 -> grid=(1, 2, 1)).
    p3, t3 = _make_inputs(keys[2], (1, 3, 128, 16))
    got3, _ = blur_vector_loss(p3, t3, block_budget_bytes=8 * 3 * 128 * 4)
    _check(got3, _reference_loss(p3, t3))

    # 4) magnitude_only: channel-pruned (1-channel) blocks, no direction math.
    got4, _ = blur_vector_loss(p1, t1, magnitude_only=True)
    _check(got4, _reference_loss(p1, t1, magnitude_only=True))

    # 5) use_magnitude_weighting=False.
    got5, _ = blur_vector_loss(p2, t2, use_magnitude_weighting=False)
    _check(got5, _reference_loss(p2, t2, use_magnitude_weighting=False))

    # 6) All target magnitudes below epsilon -> mask-count==0 fallback branch.
    t6 = t1.at[:, 2].set(0.0)
    got6, _ = blur_vector_loss(p1, t6)
    _check(got6, _reference_loss(p1, t6))

    print("KERNEL_OK")
</pallas_src>

<mosaic_0001>
module attributes {stable_mosaic.version = 11 : i64} {
  func.func @_partial_sums_kernel(%arg0: i32, %arg1: i32, %arg2: i32, %arg3: memref<2x3x2x128xf32, #tpu.memory_space<vmem>>, %arg4: memref<2x3x2x128xf32, #tpu.memory_space<vmem>>, %arg5: memref<1x5x8x128xf32, #tpu.memory_space<vmem>>) attributes {dimension_semantics = [#tpu.dimension_semantics<parallel>, #tpu.dimension_semantics<parallel>, #tpu.dimension_semantics<arbitrary>], iteration_bounds = array<i64: 1, 1, 1>, scalar_prefetch = 0 : i64, scratch_operands = 0 : i64, tpu.core_type = #tpu.core_type<tc>, window_params = [{transform_indices = @transform_0, window_bounds = array<i64: 2, 3, 2, 128>}, {transform_indices = @transform_1, window_bounds = array<i64: 2, 3, 2, 128>}, {transform_indices = @transform_2, window_bounds = array<i64: 1, 5, 8, 128>}]} {
    %c0_i32 = arith.constant 0 : i32
    %0 = arith.cmpi eq, %arg2, %c0_i32 : i32
    %1 = arith.extui %0 : i1 to i32
    %c0_i32_0 = arith.constant 0 : i32
    %2 = arith.cmpi ne, %1, %c0_i32_0 : i32
    scf.if %2 {
      %cst_68 = arith.constant 0.000000e+00 : f32
      %96 = vector.broadcast %cst_68 : f32 to vector<1x5x8x128xf32>
      %c0_69 = arith.constant 0 : index
      %c0_70 = arith.constant 0 : index
      %c0_71 = arith.constant 0 : index
      %c0_72 = arith.constant 0 : index
      %97 = vector.load %arg5[%c0_69, %c0_70, %c0_71, %c0_72] : memref<1x5x8x128xf32, #tpu.memory_space<vmem>>, vector<1x5x8x128xf32>
      tpu.vector_store %arg5[%c0_69, %c0_70, %c0_71, %c0_72], %96 {strides = array<i32>} : memref<1x5x8x128xf32, #tpu.memory_space<vmem>>, vector<1x5x8x128xf32>,
    } else {
    }
    %c0 = arith.constant 0 : index
    %c0_1 = arith.constant 0 : index
    %c0_2 = arith.constant 0 : index
    %c0_3 = arith.constant 0 : index
    %3 = vector.load %arg3[%c0, %c0_1, %c0_2, %c0_3] : memref<2x3x2x128xf32, #tpu.memory_space<vmem>>, vector<2x1x2x128xf32>
    %4 = vector.shape_cast %3 : vector<2x1x2x128xf32> to vector<2x2x128xf32>
    %c0_4 = arith.constant 0 : index
    %c1 = arith.constant 1 : index
    %c0_5 = arith.constant 0 : index
    %c0_6 = arith.constant 0 : index
    %5 = vector.load %arg3[%c0_4, %c1, %c0_5, %c0_6] : memref<2x3x2x128xf32, #tpu.memory_space<vmem>>, vector<2x1x2x128xf32>
    %6 = vector.shape_cast %5 : vector<2x1x2x128xf32> to vector<2x2x128xf32>
    %c0_7 = arith.constant 0 : index
    %c2 = arith.constant 2 : index
    %c0_8 = arith.constant 0 : index
    %c0_9 = arith.constant 0 : index
    %7 = vector.load %arg3[%c0_7, %c2, %c0_8, %c0_9] : memref<2x3x2x128xf32, #tpu.memory_space<vmem>>, vector<2x1x2x128xf32>
    %8 = vector.shape_cast %7 : vector<2x1x2x128xf32> to vector<2x2x128xf32>
    %c0_10 = arith.constant 0 : index
    %c0_11 = arith.constant 0 : index
    %c0_12 = arith.constant 0 : index
    %c0_13 = arith.constant 0 : index
    %9 = vector.load %arg4[%c0_10, %c0_11, %c0_12, %c0_13] : memref<2x3x2x128xf32, #tpu.memory_space<vmem>>, vector<2x1x2x128xf32>
    %10 = vector.shape_cast %9 : vector<2x1x2x128xf32> to vector<2x2x128xf32>
    %c0_14 = arith.constant 0 : index
    %c1_15 = arith.constant 1 : index
    %c0_16 = arith.constant 0 : index
    %c0_17 = arith.constant 0 : index
    %11 = vector.load %arg4[%c0_14, %c1_15, %c0_16, %c0_17] : memref<2x3x2x128xf32, #tpu.memory_space<vmem>>, vector<2x1x2x128xf32>
    %12 = vector.shape_cast %11 : vector<2x1x2x128xf32> to vector<2x2x128xf32>
    %c0_18 = arith.constant 0 : index
    %c2_19 = arith.constant 2 : index
    %c0_20 = arith.constant 0 : index
    %c0_21 = arith.constant 0 : index
    %13 = vector.load %arg4[%c0_18, %c2_19, %c0_20, %c0_21] : memref<2x3x2x128xf32, #tpu.memory_space<vmem>>, vector<2x1x2x128xf32>
    %14 = vector.shape_cast %13 : vector<2x1x2x128xf32> to vector<2x2x128xf32>
    %15 = arith.mulf %4, %4 : vector<2x2x128xf32>
    %16 = arith.mulf %6, %6 : vector<2x2x128xf32>
    %17 = arith.addf %15, %16 : vector<2x2x128xf32>
    %cst = arith.constant 9.99999997E-7 : f32
    %18 = vector.broadcast %cst : f32 to vector<2x2x128xf32>
    %19 = arith.addf %17, %18 : vector<2x2x128xf32>
    %20 = math.rsqrt %19 : vector<2x2x128xf32>
    %21 = arith.mulf %10, %10 : vector<2x2x128xf32>
    %22 = arith.mulf %12, %12 : vector<2x2x128xf32>
    %23 = arith.addf %21, %22 : vector<2x2x128xf32>
    %cst_22 = arith.constant 9.99999997E-7 : f32
    %24 = vector.broadcast %cst_22 : f32 to vector<2x2x128xf32>
    %25 = arith.addf %23, %24 : vector<2x2x128xf32>
    %26 = math.rsqrt %25 : vector<2x2x128xf32>
    %27 = arith.mulf %4, %10 : vector<2x2x128xf32>
    %28 = arith.mulf %6, %12 : vector<2x2x128xf32>
    %29 = arith.addf %27, %28 : vector<2x2x128xf32>
    %30 = arith.mulf %20, %26 : vector<2x2x128xf32>
    %31 = arith.mulf %29, %30 : vector<2x2x128xf32>
    %cst_23 = arith.constant 1.000000e+00 : f32
    %32 = vector.broadcast %cst_23 : f32 to vector<2x2x128xf32>
    %33 = arith.subf %32, %31 : vector<2x2x128xf32>
    %34 = arith.subf %8, %14 : vector<2x2x128xf32>
    %cst_24 = arith.constant 9.99999997E-7 : f32
    %35 = vector.broadcast %cst_24 : f32 to vector<2x2x128xf32>
    %36 = arith.cmpf ogt, %14, %35 : vector<2x2x128xf32>
    %37 = arith.extui %36 : vector<2x2x128xi1> to vector<2x2x128xi32>
    %38 = arith.sitofp %37 : vector<2x2x128xi32> to vector<2x2x128xf32>
    %39 = arith.mulf %33, %14 : vector<2x2x128xf32>
    %c0_25 = arith.constant 0 : index
    %c0_26 = arith.constant 0 : index
    %c0_27 = arith.constant 0 : index
    %c0_28 = arith.constant 0 : index
    %40 = vector.load %arg5[%c0_25, %c0_26, %c0_27, %c0_28] : memref<1x5x8x128xf32, #tpu.memory_space<vmem>>, vector<1x1x8x128xf32>
    %41 = vector.shape_cast %40 : vector<1x1x8x128xf32> to vector<8x128xf32>
    %42 = vector.shape_cast %39 : vector<2x2x128xf32> to vector<1x2x2x128xf32>
    %cst_29 = arith.constant dense<0.000000e+00> : vector<1xf32>
    %43 = vector.multi_reduction <add>, %42, %cst_29 [1, 2, 3] : vector<1x2x2x128xf32> to vector<1xf32>
    %44 = vector.shape_cast %43 : vector<1xf32> to vector<1x1x1x1xf32>
    %45 = vector.extract %44[0, 0, 0, 0] : f32 from vector<1x1x1x1xf32>
    %46 = vector.broadcast %45 : f32 to vector<8x128xf32>
    %47 = arith.addf %41, %46 : vector<8x128xf32>
    %c0_30 = arith.constant 0 : index
    %c0_31 = arith.constant 0 : index
    %c0_32 = arith.constant 0 : index
    %c0_33 = arith.constant 0 : index
    %48 = vector.load %arg5[%c0_30, %c0_31, %c0_32, %c0_33] : memref<1x5x8x128xf32, #tpu.memory_space<vmem>>, vector<1x1x8x128xf32>
    %49 = vector.shape_cast %48 : vector<1x1x8x128xf32> to vector<8x128xf32>
    %50 = vector.shape_cast %47 : vector<8x128xf32> to vector<1x1x8x128xf32>
    tpu.vector_store %arg5[%c0_30, %c0_31, %c0_32, %c0_33], %50 {strides = array<i32>} : memref<1x5x8x128xf32, #tpu.memory_space<vmem>>, vector<1x1x8x128xf32>,
    %c0_34 = arith.constant 0 : index
    %c1_35 = arith.constant 1 : index
    %c0_36 = arith.constant 0 : index
    %c0_37 = arith.constant 0 : index
    %51 = vector.load %arg5[%c0_34, %c1_35, %c0_36, %c0_37] : memref<1x5x8x128xf32, #tpu.memory_space<vmem>>, vector<1x1x8x128xf32>
    %52 = vector.shape_cast %51 : vector<1x1x8x128xf32> to vector<8x128xf32>
    %53 = vector.shape_cast %33 : vector<2x2x128xf32> to vector<1x2x2x128xf32>
    %cst_38 = arith.constant dense<0.000000e+00> : vector<1xf32>
    %54 = vector.multi_reduction <add>, %53, %cst_38 [1, 2, 3] : vector<1x2x2x128xf32> to vector<1xf32>
    %55 = vector.shape_cast %54 : vector<1xf32> to vector<1x1x1x1xf32>
    %56 = vector.extract %55[0, 0, 0, 0] : f32 from vector<1x1x1x1xf32>
    %57 = vector.broadcast %56 : f32 to vector<8x128xf32>
    %58 = arith.addf %52, %57 : vector<8x128xf32>
    %c0_39 = arith.constant 0 : index
    %c1_40 = arith.constant 1 : index
    %c0_41 = arith.constant 0 : index
    %c0_42 = arith.constant 0 : index
    %59 = vector.load %arg5[%c0_39, %c1_40, %c0_41, %c0_42] : memref<1x5x8x128xf32, #tpu.memory_space<vmem>>, vector<1x1x8x128xf32>
    %60 = vector.shape_cast %59 : vector<1x1x8x128xf32> to vector<8x128xf32>
    %61 = vector.shape_cast %58 : vector<8x128xf32> to vector<1x1x8x128xf32>
    tpu.vector_store %arg5[%c0_39, %c1_40, %c0_41, %c0_42], %61 {strides = array<i32>} : memref<1x5x8x128xf32, #tpu.memory_space<vmem>>, vector<1x1x8x128xf32>,
    %c0_43 = arith.constant 0 : index
    %c2_44 = arith.constant 2 : index
    %c0_45 = arith.constant 0 : index
    %c0_46 = arith.constant 0 : index
    %62 = vector.load %arg5[%c0_43, %c2_44, %c0_45, %c0_46] : memref<1x5x8x128xf32, #tpu.memory_space<vmem>>, vector<1x1x8x128xf32>
    %63 = vector.shape_cast %62 : vector<1x1x8x128xf32> to vector<8x128xf32>
    %64 = vector.shape_cast %14 : vector<2x2x128xf32> to vector<1x2x2x128xf32>
    %cst_47 = arith.constant dense<0.000000e+00> : vector<1xf32>
    %65 = vector.multi_reduction <add>, %64, %cst_47 [1, 2, 3] : vector<1x2x2x128xf32> to vector<1xf32>
    %66 = vector.shape_cast %65 : vector<1xf32> to vector<1x1x1x1xf32>
    %67 = vector.extract %66[0, 0, 0, 0] : f32 from vector<1x1x1x1xf32>
    %68 = vector.broadcast %67 : f32 to vector<8x128xf32>
    %69 = arith.addf %63, %68 : vector<8x128xf32>
    %c0_48 = arith.constant 0 : index
    %c2_49 = arith.constant 2 : index
    %c0_50 = arith.constant 0 : index
    %c0_51 = arith.constant 0 : index
    %70 = vector.load %arg5[%c0_48, %c2_49, %c0_50, %c0_51] : memref<1x5x8x128xf32, #tpu.memory_space<vmem>>, vector<1x1x8x128xf32>
    %71 = vector.shape_cast %70 : vector<1x1x8x128xf32> to vector<8x128xf32>
    %72 = vector.shape_cast %69 : vector<8x128xf32> to vector<1x1x8x128xf32>
    tpu.vector_store %arg5[%c0_48, %c2_49, %c0_50, %c0_51], %72 {strides = array<i32>} : memref<1x5x8x128xf32, #tpu.memory_space<vmem>>, vector<1x1x8x128xf32>,
    %c0_52 = arith.constant 0 : index
    %c3 = arith.constant 3 : index
    %c0_53 = arith.constant 0 : index
    %c0_54 = arith.constant 0 : index
    %73 = vector.load %arg5[%c0_52, %c3, %c0_53, %c0_54] : memref<1x5x8x128xf32, #tpu.memory_space<vmem>>, vector<1x1x8x128xf32>
    %74 = vector.shape_cast %73 : vector<1x1x8x128xf32> to vector<8x128xf32>
    %75 = vector.shape_cast %38 : vector<2x2x128xf32> to vector<1x2x2x128xf32>
    %cst_55 = arith.constant dense<0.000000e+00> : vector<1xf32>
    %76 = vector.multi_reduction <add>, %75, %cst_55 [1, 2, 3] : vector<1x2x2x128xf32> to vector<1xf32>
    %77 = vector.shape_cast %76 : vector<1xf32> to vector<1x1x1x1xf32>
    %78 = vector.extract %77[0, 0, 0, 0] : f32 from vector<1x1x1x1xf32>
    %79 = vector.broadcast %78 : f32 to vector<8x128xf32>
    %80 = arith.addf %74, %79 : vector<8x128xf32>
    %c0_56 = arith.constant 0 : index
    %c3_57 = arith.constant 3 : index
    %c0_58 = arith.constant 0 : index
    %c0_59 = arith.constant 0 : index
    %81 = vector.load %arg5[%c0_56, %c3_57, %c0_58, %c0_59] : memref<1x5x8x128xf32, #tpu.memory_space<vmem>>, vector<1x1x8x128xf32>
    %82 = vector.shape_cast %81 : vector<1x1x8x128xf32> to vector<8x128xf32>
    %83 = vector.shape_cast %80 : vector<8x128xf32> to vector<1x1x8x128xf32>
    tpu.vector_store %arg5[%c0_56, %c3_57, %c0_58, %c0_59], %83 {strides = array<i32>} : memref<1x5x8x128xf32, #tpu.memory_space<vmem>>, vector<1x1x8x128xf32>,
    %84 = arith.mulf %34, %34 : vector<2x2x128xf32>
    %c0_60 = arith.constant 0 : index
    %c4 = arith.constant 4 : index
    %c0_61 = arith.constant 0 : index
    %c0_62 = arith.constant 0 : index
    %85 = vector.load %arg5[%c0_60, %c4, %c0_61, %c0_62] : memref<1x5x8x128xf32, #tpu.memory_space<vmem>>, vector<1x1x8x128xf32>
    %86 = vector.shape_cast %85 : vector<1x1x8x128xf32> to vector<8x128xf32>
    %87 = vector.shape_cast %84 : vector<2x2x128xf32> to vector<1x2x2x128xf32>
    %cst_63 = arith.constant dense<0.000000e+00> : vector<1xf32>
    %88 = vector.multi_reduction <add>, %87, %cst_63 [1, 2, 3] : vector<1x2x2x128xf32> to vector<1xf32>
    %89 = vector.shape_cast %88 : vector<1xf32> to vector<1x1x1x1xf32>
    %90 = vector.extract %89[0, 0, 0, 0] : f32 from vector<1x1x1x1xf32>
    %91 = vector.broadcast %90 : f32 to vector<8x128xf32>
    %92 = arith.addf %86, %91 : vector<8x128xf32>
    %c0_64 = arith.constant 0 : index
    %c4_65 = arith.constant 4 : index
    %c0_66 = arith.constant 0 : index
    %c0_67 = arith.constant 0 : index
    %93 = vector.load %arg5[%c0_64, %c4_65, %c0_66, %c0_67] : memref<1x5x8x128xf32, #tpu.memory_space<vmem>>, vector<1x1x8x128xf32>
    %94 = vector.shape_cast %93 : vector<1x1x8x128xf32> to vector<8x128xf32>
    %95 = vector.shape_cast %92 : vector<8x128xf32> to vector<1x1x8x128xf32>
    tpu.vector_store %arg5[%c0_64, %c4_65, %c0_66, %c0_67], %95 {strides = array<i32>} : memref<1x5x8x128xf32, #tpu.memory_space<vmem>>, vector<1x1x8x128xf32>,
    return
  }
  func.func @transform_0(%arg0: i32, %arg1: i32, %arg2: i32) -> (i32, i32, i32, i32) {
    %c1_i32 = arith.constant 1 : i32
    %0 = arith.muli %arg1, %c1_i32 : i32
    %1 = arith.addi %0, %arg2 : i32
    %c0_i32 = arith.constant 0 : i32
    %c0_i32_0 = arith.constant 0 : i32
    %c0_i32_1 = arith.constant 0 : i32
    return %arg0, %c0_i32, %1, %c0_i32_0 : i32, i32, i32, i32
  }
  func.func @transform_1(%arg0: i32, %arg1: i32, %arg2: i32) -> (i32, i32, i32, i32) {
    %c1_i32 = arith.constant 1 : i32
    %0 = arith.muli %arg1, %c1_i32 : i32
    %1 = arith.addi %0, %arg2 : i32
    %c0_i32 = arith.constant 0 : i32
    %c0_i32_0 = arith.constant 0 : i32
    %c0_i32_1 = arith.constant 0 : i32
    return %arg0, %c0_i32, %1, %c0_i32_0 : i32, i32, i32, i32
  }
  func.func @transform_2(%arg0: i32, %arg1: i32, %arg2: i32) -> (i32, i32, i32, i32) {
    %c1_i32 = arith.constant 1 : i32
    %0 = arith.muli %arg0, %c1_i32 : i32
    %1 = arith.addi %0, %arg1 : i32
    %c0_i32 = arith.constant 0 : i32
    %c0_i32_0 = arith.constant 0 : i32
    %c0_i32_1 = arith.constant 0 : i32
    %c0_i32_2 = arith.constant 0 : i32
    return %1, %c0_i32, %c0_i32_0, %c0_i32_1 : i32, i32, i32, i32
  }
}

</mosaic_0001>

<llo_original>
// kernel: tpu_custom_call.1
$region0: #{tpu_custom_call.1}
  #allocation0 [shape = 'u32[]', space=smem, size = 0x4, offset = 0x4, fixed_abs, tag = 'smem constant byte address 0x4 - core index']
  #allocation1 [shape = 'u32[144,128]{1,0:T(1,128)}', space=vmem, size = 0x12000, scoped, tag = 'internal scratch']
  %s0 = inlined_call_operand.hbm [shape: f32[2,3,2,128], index: 0, kind: input, shape index: {}]
  %s1 = inlined_call_operand.hbm [shape: f32[2,3,2,128], index: 1, kind: input, shape index: {}]
  %s2 = inlined_call_operand.hbm [shape: f32[1,5,8,128], index: 2, kind: output, shape index: {}]
  %s3 = sld [smem:[#allocation0]]
  $region30: #{tpu_custom_call.1} parent=0
    _
  %s5 = ssub.s32 1, %s3
  %s6 = scalar_select 0, %s5, %s3
  $region1: #{tpu_custom_call.1} parent=0
    #allocation2 [shape = 'u8[6144]{0}', space=vmem, size = 0x1800, scoped, tag = 'input window, operand 0, single buffered']
    #allocation3 [shape = 's32[1]{0}', space=sflag, size = 0x4, scoped, tag = 'scoped memory for tpu_custom_call.1']
    #allocation4 [shape = 's32[1]{0}', space=sflag, size = 0x4, scoped, tag = 'scoped memory for tpu_custom_call.1']
    #allocation5 [shape = 'u8[6144]{0}', space=vmem, size = 0x1800, scoped, tag = 'input window, operand 1, single buffered']
    #allocation6 [shape = 's32[1]{0}', space=sflag, size = 0x4, scoped, tag = 'scoped memory for tpu_custom_call.1']
    #allocation7 [shape = 'u8[20480]{0}', space=vmem, size = 0x5000, scoped, tag = 'output window, operand 0, single buffered']
    %7 = vsyncpa [#allocation3], 0
    %8 = vsyncpa [#allocation6], 0
    %9 = vsyncpa [#allocation4], 0
    // Predicated region
    $region2: #{tpu_custom_call.1} parent=1 // pred_check
      _
    $region3: #{tpu_custom_call.1} parent=1 // pred_check_branch
      %11 = sbr.rel (0) target = $region5
    $region4: #{tpu_custom_call.1} parent=1 // pred_region
      %s12 = sadd.s32 0, 0
      %s14 = ssub.s32 192, 192
      %15 = vsyncadd [#allocation3], %s14
      %s16 = smul.addr %s12, 32
      %s17 = scalar_lea.hbm %s0, %s16
      %s18 = sshll.u32 [#allocation2], 4
      %s19 = int_to_ptr.vmem [resolvable:$true] %s18
      %24 = dma.hbm_to_vmem [thread:$0]  %s17, 192, %s19, [#allocation3], 32, 32, 2
    $region5: #{tpu_custom_call.1} parent=1 // pred_fallthru
      _
    // Predicated region
    $region6: #{tpu_custom_call.1} parent=1 // pred_check
      _
    $region7: #{tpu_custom_call.1} parent=1 // pred_check_branch
      %26 = sbr.rel (0) target = $region9
    $region8: #{tpu_custom_call.1} parent=1 // pred_region
      %s27 = sadd.s32 0, 0
      %s29 = ssub.s32 192, 192
      %30 = vsyncadd [#allocation6], %s29
      %s31 = smul.addr %s27, 32
      %s32 = scalar_lea.hbm %s1, %s31
      %s33 = sshll.u32 [#allocation5], 4
      %s34 = int_to_ptr.vmem [resolvable:$true] %s33
      %39 = dma.hbm_to_vmem [thread:$0]  %s32, 192, %s34, [#allocation6], 32, 32, 2
    $region9: #{tpu_custom_call.1} parent=1 // pred_fallthru
      _
    // Predicated region
    $region10: #{tpu_custom_call.1} parent=1 // pred_check
      _
    $region11: #{tpu_custom_call.1} parent=1 // pred_check_branch
      %41 = sbr.rel (0) target = $region13
    $region12: #{tpu_custom_call.1} parent=1 // pred_region
      %42 = dma.done [#allocation3], 192
    $region13: #{tpu_custom_call.1} parent=1 // pred_fallthru
      _
    // Predicated region
    $region14: #{tpu_custom_call.1} parent=1 // pred_check
      _
    $region15: #{tpu_custom_call.1} parent=1 // pred_check_branch
      %44 = sbr.rel (0) target = $region17
    $region16: #{tpu_custom_call.1} parent=1 // pred_region
      %45 = dma.done [#allocation6], 192
    $region17: #{tpu_custom_call.1} parent=1 // pred_fallthru
      _
    %s46 = sadd.s32 0, 0
    %s47 = sadd.s32 0, 0
    %s48 = sadd.s32 0, 0
    %p49 = scmp.eq.s32.totalorder 0, 0
    // Predicated region
    $region18: #{tpu_custom_call.1} parent=1 // pred_check
      %p50 = pneg %p49
    $region19: #{tpu_custom_call.1} parent=1 // pred_check_branch
      %52 = sbr.rel (%p50) target = $region21
    $region20: #{tpu_custom_call.1} parent=1 // pred_region
      %53 = vst [vmem:[#allocation7] sm:$0xff] 0.0
      %54 = vst [vmem:[#allocation7 + $0x8] sm:$0xff] 0.0
      %55 = vst [vmem:[#allocation7 + $0x10] sm:$0xff] 0.0
      %56 = vst [vmem:[#allocation7 + $0x18] sm:$0xff] 0.0
      %57 = vst [vmem:[#allocation7 + $0x20] sm:$0xff] 0.0
    $region21: #{tpu_custom_call.1} parent=1 // pred_fallthru
      _
    %v58 = vld [vmem:[#allocation2] sm:$0x3]
    %v59 = vld [vmem:[#allocation2 + $0x6] sm:$0x3]
    %s60 = scalar_lea.vmem [#allocation2], 2
    %v61 = vld [vmem:[%s60] sm:$0x3]
    %v62 = vld [vmem:[%s60 + $0x6] sm:$0x3]
    %s63 = scalar_lea.vmem [#allocation2], 4
    %v64 = vld [vmem:[%s63] sm:$0x3]
    %v65 = vld [vmem:[%s63 + $0x6] sm:$0x3]
    %v66 = vld [vmem:[#allocation5] sm:$0x3]
    %v67 = vld [vmem:[#allocation5 + $0x6] sm:$0x3]
    %s68 = scalar_lea.vmem [#allocation5], 2
    %v69 = vld [vmem:[%s68] sm:$0x3]
    %v70 = vld [vmem:[%s68 + $0x6] sm:$0x3]
    %s71 = scalar_lea.vmem [#allocation5], 4
    %v72 = vld [vmem:[%s71] sm:$0x3]
    %v73 = vld [vmem:[%s71 + $0x6] sm:$0x3]
    %v74 = vmul.f32 %v58, %v58
    %v75 = vmul.f32 %v59, %v59
    %v76 = vmul.f32 %v61, %v61
    %v77 = vmul.f32 %v62, %v62
    %v78 = vadd.f32 %v74, %v76
    %v79 = vadd.f32 %v75, %v77
    %v80 = vadd.f32 %v78, 1e-06
    %v81 = vadd.f32 %v79, 1e-06
    %v82 = vrsqrt.pop %v80
    %v83 = vrsqrt.pop %v81
    %v84 = vmul.f32 %v66, %v66
    %v85 = vmul.f32 %v67, %v67
    %v86 = vmul.f32 %v69, %v69
    %v87 = vmul.f32 %v70, %v70
    %v88 = vadd.f32 %v84, %v86
    %v89 = vadd.f32 %v85, %v87
    %v90 = vadd.f32 %v88, 1e-06
    %v91 = vadd.f32 %v89, 1e-06
    %v92 = vrsqrt.pop %v90
    %v93 = vrsqrt.pop %v91
    %v94 = vmul.f32 %v58, %v66
    %v95 = vmul.f32 %v59, %v67
    %v96 = vmul.f32 %v61, %v69
    %v97 = vmul.f32 %v62, %v70
    %v98 = vadd.f32 %v94, %v96
    %v99 = vadd.f32 %v95, %v97
    %v100 = vmul.f32 %v82, %v92
    %v101 = vmul.f32 %v83, %v93
    %v102 = vmul.f32 %v98, %v100
    %v103 = vmul.f32 %v99, %v101
    %v104 = vsub.f32 1.0, %v102
    %v105 = vsub.f32 1.0, %v103
    %v106 = vsub.f32 %v64, %v72
    %v107 = vsub.f32 %v65, %v73
    %vm108 = vcmp.gt.f32.partialorder %v72, 1e-06
    %vm109 = vcmp.gt.f32.partialorder %v73, 1e-06
    %v110 = vsel %vm108, 1, 0
    %v111 = vsel %vm109, 1, 0
    %v112 = vcvt.s32.f32 %v110
    %v113 = vcvt.s32.f32 %v111
    %v114 = vmul.f32 %v104, %v72
    %v115 = vmul.f32 %v105, %v73
    %v116 = vld [vmem:[#allocation7] sm:$0xff]
    %vm117 = vcmask 1041408
    %v118 = vsel %vm117, %v114, 0.0
    %v119 = vsel %vm117, %v115, 0.0
    %v120 = vadd.f32 %v118, %v119
    %121 = vadd.xlane.f32.xlu0 %v120
    %v122 = vpop.xlane.xlu0 %121
    %v123 = vrot.slane %v122, 4
    %v124 = vadd.f32 %v122, %v123
    %v125 = vrot.slane %v124, 2
    %v126 = vadd.f32 %v124, %v125
    %v127 = vrot.slane %v126, 1
    %v128 = vadd.f32 %v126, %v127
    %s129 = vtos %v128
    %v130 = vstv %s129
    %v131 = vadd.f32 %v116, %v130
    %132 = vst [vmem:[#allocation7] sm:$0xff] %v131
    %s133 = scalar_lea.vmem [#allocation7], 8
    %v134 = vld [vmem:[%s133] sm:$0xff]
    %v135 = vsel %vm117, %v104, 0.0
    %v136 = vsel %vm117, %v105, 0.0
    %v137 = vadd.f32 %v135, %v136
    %138 = vadd.xlane.f32.xlu0 %v137
    %v139 = vpop.xlane.xlu0 %138
    %v140 = vrot.slane %v139, 4
    %v141 = vadd.f32 %v139, %v140
    %v142 = vrot.slane %v141, 2
    %v143 = vadd.f32 %v141, %v142
    %v144 = vrot.slane %v143, 1
    %v145 = vadd.f32 %v143, %v144
    %s146 = vtos %v145
    %v147 = vstv %s146
    %v148 = vadd.f32 %v134, %v147
    %149 = vst [vmem:[%s133] sm:$0xff] %v148
    %s150 = scalar_lea.vmem [#allocation7], 16
    %v151 = vld [vmem:[%s150] sm:$0xff]
    %v152 = vsel %vm117, %v72, 0.0
    %v153 = vsel %vm117, %v73, 0.0
    %v154 = vadd.f32 %v152, %v153
    %155 = vadd.xlane.f32.xlu0 %v154
    %v156 = vpop.xlane.xlu0 %155
    %v157 = vrot.slane %v156, 4
    %v158 = vadd.f32 %v156, %v157
    %v159 = vrot.slane %v158, 2
    %v160 = vadd.f32 %v158, %v159
    %v161 = vrot.slane %v160, 1
    %v162 = vadd.f32 %v160, %v161
    %s163 = vtos %v162
    %v164 = vstv %s163
    %v165 = vadd.f32 %v151, %v164
    %166 = vst [vmem:[%s150] sm:$0xff] %v165
    %s167 = scalar_lea.vmem [#allocation7], 24
    %v168 = vld [vmem:[%s167] sm:$0xff]
    %v169 = vsel %vm117, %v112, 0.0
    %v170 = vsel %vm117, %v113, 0.0
    %v171 = vadd.f32 %v169, %v170
    %172 = vadd.xlane.f32.xlu0 %v171
    %v173 = vpop.xlane.xlu0 %172
    %v174 = vrot.slane %v173, 4
    %v175 = vadd.f32 %v173, %v174
    %v176 = vrot.slane %v175, 2
    %v177 = vadd.f32 %v175, %v176
    %v178 = vrot.slane %v177, 1
    %v179 = vadd.f32 %v177, %v178
    %s180 = vtos %v179
    %v181 = vstv %s180
    %v182 = vadd.f32 %v168, %v181
    %183 = vst [vmem:[%s167] sm:$0xff] %v182
    %v184 = vmul.f32 %v106, %v106
    %v185 = vmul.f32 %v107, %v107
    %s186 = scalar_lea.vmem [#allocation7], 32
    %v187 = vld [vmem:[%s186] sm:$0xff]
    %v188 = vsel %vm117, %v184, 0.0
    %v189 = vsel %vm117, %v185, 0.0
    %v190 = vadd.f32 %v188, %v189
    %191 = vadd.xlane.f32.xlu0 %v190
    %v192 = vpop.xlane.xlu0 %191
    %v193 = vrot.slane %v192, 4
    %v194 = vadd.f32 %v192, %v193
    %v195 = vrot.slane %v194, 2
    %v196 = vadd.f32 %v194, %v195
    %v197 = vrot.slane %v196, 1
    %v198 = vadd.f32 %v196, %v197
    %s199 = vtos %v198
    %v200 = vstv %s199
    %v201 = vadd.f32 %v187, %v200
    %202 = vst [vmem:[%s186] sm:$0xff] %v201
    // Predicated region
    $region22: #{tpu_custom_call.1} parent=1 // pred_check
      _
    $region23: #{tpu_custom_call.1} parent=1 // pred_check_branch
      %204 = sbr.rel (0) target = $region25
    $region24: #{tpu_custom_call.1} parent=1 // pred_region
      %s205 = sadd.s32 0, 0
      %s207 = ssub.s32 640, 640
      %208 = vsyncadd [#allocation4], %s207
      %s209 = smul.addr %s205, 5
      %s210 = smul.addr %s209, 128
      %s211 = scalar_lea.hbm %s2, %s210
      %s212 = sshll.u32 [#allocation7], 4
      %s213 = int_to_ptr.vmem [resolvable:$true] %s212
      %218 = dma.vmem_to_hbm [thread:$0]  %s213, 640, %s211, [#allocation4], 128, 128, 8
    $region25: #{tpu_custom_call.1} parent=1 // pred_fallthru
      _
    // Predicated region
    $region26: #{tpu_custom_call.1} parent=1 // pred_check
      _
    $region27: #{tpu_custom_call.1} parent=1 // pred_check_branch
      %220 = sbr.rel (0) target = $region29
    $region28: #{tpu_custom_call.1} parent=1 // pred_region
      %221 = dma.done [#allocation4], 640
    $region29: #{tpu_custom_call.1} parent=1 // pred_fallthru
      _
    %222 = vsyncpa [#allocation3], 1
    %223 = vsyncpa [#allocation6], 1
    %224 = vsyncpa [#allocation4], 1

</llo_original>
